<compile_context>
chip_gen: v6e
topology: v6e:2x2x1
jax: 0.10.0
libtpu: 0.0.40
codegen_flags: <defaults>
</compile_context>

<pallas_src>
import jax
import jax.numpy as jnp
from jax import lax
from jax.experimental import pallas as pl
from jax.experimental.pallas import tpu as pltpu

EPS = 1e-5  # PyTorch BatchNorm1d default eps

_HC, _HD = 8, 10          # class-head width, domain-head width after fc1
_H = _HC + _HD            # 18 = packed hidden width
_OUT = 4                  # class logits (2) + domain logits (2)


# ----------------------------------------------------------------------------
# Kernel
# ----------------------------------------------------------------------------
def dann_kernel(x_ref, w1_ref, b1_ref, w2_ref, b2_ref, w3_ref, b3_ref, out_ref):
    """Fused DANN forward over one (TB, dim) batch tile.

    stage 1: x @ [c_fc1+bn | d_fc1+bn]  -> (TB, 18), ReLU
    stage 2: h @ [[c_fc2+bn, 0], [0, I]] -> (TB, 18), ReLU (idempotent on domain cols)
    stage 3: h @ blockdiag(c_fc3, d_fc2) -> (TB, 4)
    """
    x = x_ref[...]                                                          # bf16 (TB, dim)
    h = jnp.dot(x, w1_ref[...], preferred_element_type=jnp.float32) + b1_ref[...]
    h = jnp.maximum(h, 0.0)                                                 # c_relu1 / d_relu1
    # c_drop1: nn.Dropout -> identity in eval mode
    h = jnp.dot(h, w2_ref[...], preferred_element_type=jnp.float32) + b2_ref[...]
    h = jnp.maximum(h, 0.0)                                                 # c_relu2 (domain cols unchanged)
    out = jnp.dot(h, w3_ref[...], preferred_element_type=jnp.float32) + b3_ref[...]
    out_ref[...] = out.astype(out_ref.dtype)


# ----------------------------------------------------------------------------
# Host-side packing / wrapper
# ----------------------------------------------------------------------------
def _round_up(n, m):
    return (n + m - 1) // m * m


def fold_and_pack_params(params):
    """Fold inference-mode BatchNorm into the preceding Linear and pack both heads
    into 3 weight/bias pairs consumed by the kernel."""
    (c_w1, c_b1, c_g1, c_be1, c_m1, c_v1,
     c_w2, c_b2, c_g2, c_be2, c_m2, c_v2,
     c_w3, c_b3,
     d_w1, d_b1, d_g1, d_be1, d_m1, d_v1,
     d_w2, d_b2) = params

    def fold(wt, b, gamma, beta, mean, var):
        s = gamma * lax.rsqrt(var + EPS)          # [1, out]
        return wt * s, (b - mean) * s + beta

    cw1, cb1 = fold(c_w1, c_b1, c_g1, c_be1, c_m1, c_v1)   # c_fc1 + c_bn1
    cw2, cb2 = fold(c_w2, c_b2, c_g2, c_be2, c_m2, c_v2)   # c_fc2 + c_bn2
    dw1, db1 = fold(d_w1, d_b1, d_g1, d_be1, d_m1, d_v1)   # d_fc1 + d_bn1

    # stage 1: [dim, 18] = [class 8 | domain 10]
    w1 = jnp.concatenate([cw1, dw1], axis=1)
    b1 = jnp.concatenate([cb1, db1], axis=1)
    # stage 2: class Linear(8,8)+bn on cols 0:8, identity pass-through on domain cols 8:18
    w2 = jnp.zeros((_H, _H), jnp.float32)
    w2 = w2.at[:_HC, :_HC].set(cw2)
    w2 = w2.at[_HC:, _HC:].set(jnp.eye(_HD, dtype=jnp.float32))
    b2 = jnp.concatenate([cb2, jnp.zeros((1, _HD), jnp.float32)], axis=1)
    # stage 3: block-diagonal [18,4]: c_fc3 -> cols 0:2, d_fc2 -> cols 2:4
    w3 = jnp.zeros((_H, _OUT), jnp.float32)
    w3 = w3.at[:_HC, :2].set(c_w3)
    w3 = w3.at[_HC:, 2:].set(d_w2)
    b3 = jnp.concatenate([c_b3, d_b2], axis=1)

    # x streams bf16 -> store the x-facing weight in bf16 too; rest stays f32.
    return (w1.astype(jnp.bfloat16), b1, w2, b2, w3, b3)


def dann_forward(x, alpha, params, *, block_b=8192):
    # ReverseLayerF.apply(input_data, alpha): identity in forward; alpha only scales
    # the reversed gradient in backward.
    del alpha
    B, dim = x.shape
    packed = fold_and_pack_params(params)

    # Batch tile: big, multiple of 16 (bf16 sublane packing); pad batch to a multiple of it.
    TB = min(_round_up(block_b, 16), _round_up(B, 16))
    Bp = _round_up(B, TB)

    xb = x.astype(jnp.bfloat16)
    if Bp != B:
        xb = jnp.pad(xb, ((0, Bp - B), (0, 0)))

    grid = (Bp // TB,)
    x_spec = pl.BlockSpec((TB, dim), lambda i: (i, 0))
    # Packed params: constant index_map -> DMA'd once, stay VMEM-resident across grid steps.
    param_specs = [pl.BlockSpec(p.shape, lambda i: (0, 0)) for p in packed]
    out_spec = pl.BlockSpec((TB, _OUT), lambda i: (i, 0))

    flops = 2 * Bp * (dim * _H + _H * _H + _H * _OUT)
    bytes_accessed = int(
        Bp * dim * 2                      # bf16 x stream
        + Bp * _OUT * 4                   # f32 output slab
        + sum(int(p.size) * p.dtype.itemsize for p in packed)
    )

    out4 = pl.pallas_call(
        dann_kernel,
        out_shape=jax.ShapeDtypeStruct((Bp, _OUT), jnp.float32),
        grid=grid,
        in_specs=[x_spec] + param_specs,
        out_specs=out_spec,
        compiler_params=pltpu.CompilerParams(
            dimension_semantics=("parallel",),   # shard batch tiles across TCs on v7x
        ),
        cost_estimate=pl.CostEstimate(
            flops=flops, transcendentals=0, bytes_accessed=bytes_accessed),
    )(xb, *packed)

    class_out = out4[:B, 0:2]
    domain_out = out4[:B, 2:4]
    return class_out, domain_out


# ----------------------------------------------------------------------------
# Synthetic params + plain-JAX reference (faithful to the PyTorch module, f32)
# ----------------------------------------------------------------------------
def init_params(key, dim):
    """Deterministic synthetic parameter init (PyTorch-like uniform for Linear)."""
    ks = iter(jax.random.split(key, 32))

    def lin(in_f, out_f):
        bound = 1.0 / jnp.sqrt(in_f)
        wt = jax.random.uniform(next(ks), (in_f, out_f), jnp.float32, -bound, bound)
        b = jax.random.uniform(next(ks), (1, out_f), jnp.float32, -bound, bound)
        return wt, b

    def bn(n):
        gamma = jax.random.uniform(next(ks), (1, n), jnp.float32, 0.8, 1.2)
        beta = jax.random.uniform(next(ks), (1, n), jnp.float32, -0.1, 0.1)
        mean = jax.random.uniform(next(ks), (1, n), jnp.float32, -0.5, 0.5)
        var = jax.random.uniform(next(ks), (1, n), jnp.float32, 0.5, 1.5)
        return gamma, beta, mean, var

    # class classifier
    c_w1, c_b1 = lin(dim, 8)
    c_g1, c_be1, c_m1, c_v1 = bn(8)
    # TODO(synk): original module declares c_fc2 = nn.Linear(16, 8), which is shape-incompatible
    # with the 8-wide output of c_bn1 (would raise at runtime in PyTorch); implemented as Linear(8, 8).
    c_w2, c_b2 = lin(8, 8)
    c_g2, c_be2, c_m2, c_v2 = bn(8)
    c_w3, c_b3 = lin(8, 2)
    # domain classifier
    d_w1, d_b1 = lin(dim, 10)
    d_g1, d_be1, d_m1, d_v1 = bn(10)
    d_w2, d_b2 = lin(10, 2)

    return (
        c_w1, c_b1, c_g1, c_be1, c_m1, c_v1,
        c_w2, c_b2, c_g2, c_be2, c_m2, c_v2,
        c_w3, c_b3,
        d_w1, d_b1, d_g1, d_be1, d_m1, d_v1,
        d_w2, d_b2,
    )


def dann_reference(x, params):
    """Plain-JAX f32 reference matching the PyTorch module (unfolded, unfused)."""
    (c_w1, c_b1, c_g1, c_be1, c_m1, c_v1,
     c_w2, c_b2, c_g2, c_be2, c_m2, c_v2,
     c_w3, c_b3,
     d_w1, d_b1, d_g1, d_be1, d_m1, d_v1,
     d_w2, d_b2) = params

    def bn(h, g, be, m, v):
        return (h - m) / jnp.sqrt(v + EPS) * g + be

    h = jnp.maximum(bn(x @ c_w1 + c_b1, c_g1, c_be1, c_m1, c_v1), 0.0)
    h = jnp.maximum(bn(h @ c_w2 + c_b2, c_g2, c_be2, c_m2, c_v2), 0.0)
    class_out = h @ c_w3 + c_b3

    g_ = jnp.maximum(bn(x @ d_w1 + d_b1, d_g1, d_be1, d_m1, d_v1), 0.0)
    domain_out = g_ @ d_w2 + d_b2
    return class_out, domain_out


if __name__ == "__main__":
    dim = 32
    batch = 8
    key = jax.random.PRNGKey(0)
    k_x, k_p = jax.random.split(key)

    x = jax.random.normal(k_x, (batch, dim), jnp.float32)
    alpha = 0.5  # only relevant for the (backward-only) gradient reversal
    params = init_params(k_p, dim)

    class_out, domain_out = dann_forward(x, alpha, params)
    jax.block_until_ready((class_out, domain_out))

    ref_class, ref_domain = dann_reference(x, params)
    assert class_out.shape == (batch, 2) and domain_out.shape == (batch, 2)
    # bf16 activation streaming + BN folding -> loose-but-meaningful tolerance vs f32 reference
    assert jnp.allclose(class_out, ref_class, atol=5e-2, rtol=5e-2)
    assert jnp.allclose(domain_out, ref_domain, atol=5e-2, rtol=5e-2)

    print("KERNEL_OK")
</pallas_src>

<mosaic_0001>
module attributes {stable_mosaic.version = 11 : i64} {
  func.func @dann_kernel(%arg0: i32, %arg1: memref<16x32xbf16, #tpu.memory_space<vmem>>, %arg2: memref<32x18xbf16, #tpu.memory_space<vmem>>, %arg3: memref<1x18xf32, #tpu.memory_space<vmem>>, %arg4: memref<18x18xf32, #tpu.memory_space<vmem>>, %arg5: memref<1x18xf32, #tpu.memory_space<vmem>>, %arg6: memref<18x4xf32, #tpu.memory_space<vmem>>, %arg7: memref<1x4xf32, #tpu.memory_space<vmem>>, %arg8: memref<16x4xf32, #tpu.memory_space<vmem>>) attributes {dimension_semantics = [#tpu.dimension_semantics<parallel>], iteration_bounds = array<i64: 1>, scalar_prefetch = 0 : i64, scratch_operands = 0 : i64, tpu.core_type = #tpu.core_type<tc>, window_params = [{transform_indices = @transform_0, window_bounds = array<i64: 16, 32>}, {pipeline_mode = #tpu.pipeline_mode<synchronous>, transform_indices = @transform_1, window_bounds = array<i64: 32, 18>}, {pipeline_mode = #tpu.pipeline_mode<synchronous>, transform_indices = @transform_2, window_bounds = array<i64: 1, 18>}, {pipeline_mode = #tpu.pipeline_mode<synchronous>, transform_indices = @transform_3, window_bounds = array<i64: 18, 18>}, {pipeline_mode = #tpu.pipeline_mode<synchronous>, transform_indices = @transform_4, window_bounds = array<i64: 1, 18>}, {pipeline_mode = #tpu.pipeline_mode<synchronous>, transform_indices = @transform_5, window_bounds = array<i64: 18, 4>}, {pipeline_mode = #tpu.pipeline_mode<synchronous>, transform_indices = @transform_6, window_bounds = array<i64: 1, 4>}, {transform_indices = @transform_7, window_bounds = array<i64: 16, 4>}]} {
    %c0 = arith.constant 0 : index
    %c0_0 = arith.constant 0 : index
    %0 = vector.load %arg1[%c0, %c0_0] : memref<16x32xbf16, #tpu.memory_space<vmem>>, vector<16x32xbf16>
    %c0_1 = arith.constant 0 : index
    %c0_2 = arith.constant 0 : index
    %1 = vector.load %arg2[%c0_1, %c0_2] : memref<32x18xbf16, #tpu.memory_space<vmem>>, vector<32x18xbf16>
    %cst = arith.constant dense<0.000000e+00> : vector<16x18xf32>
    %2 = tpu.matmul %0, %1, %cst {dimension_numbers = #tpu.dot_dimension_numbers<[1], [0], [0], [1], [0, 0, 1, 1], [], []>} : vector<16x32xbf16>, vector<32x18xbf16>, vector<16x18xf32> -> vector<16x18xf32>
    %c0_3 = arith.constant 0 : index
    %c0_4 = arith.constant 0 : index
    %3 = vector.load %arg3[%c0_3, %c0_4] : memref<1x18xf32, #tpu.memory_space<vmem>>, vector<1x18xf32>
    %4 = vector.broadcast %3 : vector<1x18xf32> to vector<16x18xf32>
    %5 = arith.addf %2, %4 : vector<16x18xf32>
    %cst_5 = arith.constant 0.000000e+00 : f32
    %6 = vector.broadcast %cst_5 : f32 to vector<16x18xf32>
    %7 = arith.maximumf %5, %6 : vector<16x18xf32>
    %c0_6 = arith.constant 0 : index
    %c0_7 = arith.constant 0 : index
    %8 = vector.load %arg4[%c0_6, %c0_7] : memref<18x18xf32, #tpu.memory_space<vmem>>, vector<18x18xf32>
    %cst_8 = arith.constant dense<0.000000e+00> : vector<16x18xf32>
    %9 = tpu.matmul %7, %8, %cst_8 {dimension_numbers = #tpu.dot_dimension_numbers<[1], [0], [0], [1], [0, 0, 1, 1], [], []>} : vector<16x18xf32>, vector<18x18xf32>, vector<16x18xf32> -> vector<16x18xf32>
    %c0_9 = arith.constant 0 : index
    %c0_10 = arith.constant 0 : index
    %10 = vector.load %arg5[%c0_9, %c0_10] : memref<1x18xf32, #tpu.memory_space<vmem>>, vector<1x18xf32>
    %11 = vector.broadcast %10 : vector<1x18xf32> to vector<16x18xf32>
    %12 = arith.addf %9, %11 : vector<16x18xf32>
    %cst_11 = arith.constant 0.000000e+00 : f32
    %13 = vector.broadcast %cst_11 : f32 to vector<16x18xf32>
    %14 = arith.maximumf %12, %13 : vector<16x18xf32>
    %c0_12 = arith.constant 0 : index
    %c0_13 = arith.constant 0 : index
    %15 = vector.load %arg6[%c0_12, %c0_13] : memref<18x4xf32, #tpu.memory_space<vmem>>, vector<18x4xf32>
    %cst_14 = arith.constant dense<0.000000e+00> : vector<16x4xf32>
    %16 = tpu.matmul %14, %15, %cst_14 {dimension_numbers = #tpu.dot_dimension_numbers<[1], [0], [0], [1], [0, 0, 1, 1], [], []>} : vector<16x18xf32>, vector<18x4xf32>, vector<16x4xf32> -> vector<16x4xf32>
    %c0_15 = arith.constant 0 : index
    %c0_16 = arith.constant 0 : index
    %17 = vector.load %arg7[%c0_15, %c0_16] : memref<1x4xf32, #tpu.memory_space<vmem>>, vector<1x4xf32>
    %18 = vector.broadcast %17 : vector<1x4xf32> to vector<16x4xf32>
    %19 = arith.addf %16, %18 : vector<16x4xf32>
    %c0_17 = arith.constant 0 : index
    %c0_18 = arith.constant 0 : index
    %20 = vector.load %arg8[%c0_17, %c0_18] : memref<16x4xf32, #tpu.memory_space<vmem>>, vector<16x4xf32>
    tpu.vector_store %arg8[%c0_17, %c0_18], %19 {strides = array<i32>} : memref<16x4xf32, #tpu.memory_space<vmem>>, vector<16x4xf32>,
    return
  }
  func.func @transform_0(%arg0: i32) -> (i32, i32) {
    %c0_i32 = arith.constant 0 : i32
    %c0_i32_0 = arith.constant 0 : i32
    return %arg0, %c0_i32 : i32, i32
  }
  func.func @transform_1(%arg0: i32) -> (i32, i32) {
    %c0_i32 = arith.constant 0 : i32
    %c0_i32_0 = arith.constant 0 : i32
    %c0_i32_1 = arith.constant 0 : i32
    return %c0_i32, %c0_i32_0 : i32, i32
  }
  func.func @transform_2(%arg0: i32) -> (i32, i32) {
    %c0_i32 = arith.constant 0 : i32
    %c0_i32_0 = arith.constant 0 : i32
    %c0_i32_1 = arith.constant 0 : i32
    return %c0_i32, %c0_i32_0 : i32, i32
  }
  func.func @transform_3(%arg0: i32) -> (i32, i32) {
    %c0_i32 = arith.constant 0 : i32
    %c0_i32_0 = arith.constant 0 : i32
    %c0_i32_1 = arith.constant 0 : i32
    return %c0_i32, %c0_i32_0 : i32, i32
  }
  func.func @transform_4(%arg0: i32) -> (i32, i32) {
    %c0_i32 = arith.constant 0 : i32
    %c0_i32_0 = arith.constant 0 : i32
    %c0_i32_1 = arith.constant 0 : i32
    return %c0_i32, %c0_i32_0 : i32, i32
  }
  func.func @transform_5(%arg0: i32) -> (i32, i32) {
    %c0_i32 = arith.constant 0 : i32
    %c0_i32_0 = arith.constant 0 : i32
    %c0_i32_1 = arith.constant 0 : i32
    return %c0_i32, %c0_i32_0 : i32, i32
  }
  func.func @transform_6(%arg0: i32) -> (i32, i32) {
    %c0_i32 = arith.constant 0 : i32
    %c0_i32_0 = arith.constant 0 : i32
    %c0_i32_1 = arith.constant 0 : i32
    return %c0_i32, %c0_i32_0 : i32, i32
  }
  func.func @transform_7(%arg0: i32) -> (i32, i32) {
    %c0_i32 = arith.constant 0 : i32
    %c0_i32_0 = arith.constant 0 : i32
    return %arg0, %c0_i32 : i32, i32
  }
}

</mosaic_0001>

<llo_original>
// kernel: tpu_custom_call.1
$region0: #{tpu_custom_call.1}
  #allocation0 [shape = 'u32[]', space=smem, size = 0x4, offset = 0x4, fixed_abs, tag = 'smem constant byte address 0x4 - core index']
  #allocation1 [shape = 'u32[144,128]{1,0:T(1,128)}', space=vmem, size = 0x12000, scoped, tag = 'internal scratch']
  %s0 = inlined_call_operand.vmem [shape: bf16[16,32], index: 0, kind: input, shape index: {}]
  %s1 = inlined_call_operand.vmem [shape: bf16[32,18], index: 1, kind: input, shape index: {}]
  %s2 = inlined_call_operand.vmem [shape: f32[1,18], index: 2, kind: input, shape index: {}]
  %s3 = inlined_call_operand.vmem [shape: f32[18,18], index: 3, kind: input, shape index: {}]
  %s4 = inlined_call_operand.vmem [shape: f32[1,18], index: 4, kind: input, shape index: {}]
  %s5 = inlined_call_operand.vmem [shape: f32[18,4], index: 5, kind: input, shape index: {}]
  %s6 = inlined_call_operand.vmem [shape: f32[1,4], index: 6, kind: input, shape index: {}]
  %s7 = inlined_call_operand.vmem [shape: f32[16,4], index: 7, kind: output, shape index: {}]
  %s8 = sld [smem:[#allocation0]]
  $region38: #{tpu_custom_call.1} parent=0
    _
  %s10 = ssub.s32 1, %s8
  %s11 = scalar_select 0, %s10, %s8
  // Predicated region
  $region2: #{tpu_custom_call.1} parent=0 // pred_check
    _
  $region3: #{tpu_custom_call.1} parent=0 // pred_check_branch
    %13 = sbr.rel (0) target = $region5
  $region4: #{tpu_custom_call.1} parent=0 // pred_region
    _
  $region5: #{tpu_custom_call.1} parent=0 // pred_fallthru
    _
  // Predicated region
  $region6: #{tpu_custom_call.1} parent=0 // pred_check
    _
  $region7: #{tpu_custom_call.1} parent=0 // pred_check_branch
    %15 = sbr.rel (0) target = $region9
  $region8: #{tpu_custom_call.1} parent=0 // pred_region
    _
  $region9: #{tpu_custom_call.1} parent=0 // pred_fallthru
    _
  // Predicated region
  $region10: #{tpu_custom_call.1} parent=0 // pred_check
    _
  $region11: #{tpu_custom_call.1} parent=0 // pred_check_branch
    %17 = sbr.rel (0) target = $region13
  $region12: #{tpu_custom_call.1} parent=0 // pred_region
    _
  $region13: #{tpu_custom_call.1} parent=0 // pred_fallthru
    _
  // Predicated region
  $region14: #{tpu_custom_call.1} parent=0 // pred_check
    _
  $region15: #{tpu_custom_call.1} parent=0 // pred_check_branch
    %19 = sbr.rel (0) target = $region17
  $region16: #{tpu_custom_call.1} parent=0 // pred_region
    _
  $region17: #{tpu_custom_call.1} parent=0 // pred_fallthru
    _
  // Predicated region
  $region18: #{tpu_custom_call.1} parent=0 // pred_check
    _
  $region19: #{tpu_custom_call.1} parent=0 // pred_check_branch
    %21 = sbr.rel (0) target = $region21
  $region20: #{tpu_custom_call.1} parent=0 // pred_region
    _
  $region21: #{tpu_custom_call.1} parent=0 // pred_fallthru
    _
  // Predicated region
  $region22: #{tpu_custom_call.1} parent=0 // pred_check
    _
  $region23: #{tpu_custom_call.1} parent=0 // pred_check_branch
    %23 = sbr.rel (0) target = $region25
  $region24: #{tpu_custom_call.1} parent=0 // pred_region
    _
  $region25: #{tpu_custom_call.1} parent=0 // pred_fallthru
    _
  // Predicated region
  $region26: #{tpu_custom_call.1} parent=0 // pred_check
    _
  $region27: #{tpu_custom_call.1} parent=0 // pred_check_branch
    %25 = sbr.rel (0) target = $region29
  $region28: #{tpu_custom_call.1} parent=0 // pred_region
    _
  $region29: #{tpu_custom_call.1} parent=0 // pred_fallthru
    _
  %v27 = vld [vmem:[%s0] sm:$0xf]
  %v28 = vld [vmem:[%s0 + $0x4] sm:$0xf]
  %v29 = vld [vmem:[%s1] sm:$0xf]
  %v30 = vld [vmem:[%s1 + $0x4] sm:$0xf]
  %v31 = vld [vmem:[%s1 + $0x8] sm:$0xf]
  %v32 = vld [vmem:[%s1 + $0xc] sm:$0xf]
  %v33 = vld [vmem:[%s2] sm:$0x1]
  %v35 = vlaneseq
  %v36 = vshrl.u32 %v35, 7
  %v37 = vsub.s32 0, %v36
  %v38 = vrot.slane %v33, %v37
  %v42 = vunpack.c.l.b16 %v27
  %v43 = vunpack.c.l.b16 %v28
  %v44 = vpack.c.b16 %v43, %v42
  %v49 = vunpack.c.l.b16 %v29
  %v50 = vunpack.c.l.b16 %v30
  %v51 = vunpack.c.l.b16 %v31
  %v52 = vunpack.c.l.b16 %v32
  %v53 = vpack.c.b16 %v50, %v49
  %v54 = vpack.c.b16 %v52, %v51
  %vm57 = vcmask 261120
  %v59 = vsel %vm57, %v44, 0
  %61 = vmatprep.subr.bf16.mxu0 0
  %62 = vmatpush1.bf16.msra.mxu0 0
  %63 = vmatprep.subr.bf16.mxu0 0
  %64 = vmatpush1.bf16.msra.mxu0 0
  %65 = vmatprep.subr.bf16.mxu0 0
  %66 = vmatpush1.bf16.msra.mxu0 0
  %67 = vmatprep.subr.bf16.mxu0 0
  %68 = vmatpush1.bf16.msra.mxu0 0
  %69 = vmatprep.subr.bf16.mxu0 0
  %70 = vmatpush1.bf16.msra.mxu0 0
  %71 = vmatprep.subr.bf16.mxu0 0
  %72 = vmatpush1.bf16.msra.mxu0 0
  %73 = vmatprep.subr.bf16.mxu0 0
  %74 = vmatpush1.bf16.msra.mxu0 %v54
  %75 = vmatprep.subr.bf16.mxu0 0
  %76 = vmatpush1.bf16.msra.mxu0 %v53
  %77 = vmatprep.subr.bf16.mxu0 0
  %78 = vmatpush2.bf16.msra.mxu0 0
  %79 = vmatprep.subr.bf16.mxu0 0
  %80 = vmatpush2.bf16.msra.mxu0 0
  %81 = vmatprep.subr.bf16.mxu0 0
  %82 = vmatpush2.bf16.msra.mxu0 0
  %83 = vmatprep.subr.bf16.mxu0 0
  %84 = vmatpush2.bf16.msra.mxu0 0
  %85 = vmatprep.subr.bf16.mxu0 0
  %86 = vmatpush2.bf16.msra.mxu0 0
  %87 = vmatprep.subr.bf16.mxu0 0
  %88 = vmatpush2.bf16.msra.mxu0 0
  %89 = vmatprep.subr.bf16.mxu0 0
  %90 = vmatpush2.bf16.msra.mxu0 0
  %91 = vmatprep.subr.bf16.mxu0 0
  %92 = vmatpush2.bf16.msra.mxu0 0
  %93 = vmatprep.mubr.bf16.mxu0 0
  %94 = vmatmul.mubr.bf16.gmra.mxu0 %v59
  %v95 = vpop.f32.mrf.mxu0
  %v96 = vadd.f32 %v38, %v95
  %v97 = vpop.f32.mrf.mxu0
  %v98 = vpop.f32.mrf.mxu0
  %v99 = vadd.f32 %v38, %v98
  %v100 = vpop.f32.mrf.mxu0
  %101 = vdwg.mxu0
  %v102 = vmax.f32 %v96, 0.0
  %v103 = vmax.f32 %v99, 0.0
  %v104 = vld [vmem:[%s3] sm:$0xff]
  %v105 = vld [vmem:[%s3 + $0x8] sm:$0xff]
  %v106 = vld [vmem:[%s3 + $0x10] sm:$0x3]
  %v107 = vld [vmem:[%s4] sm:$0x1]
  %v109 = vlaneseq
  %v110 = vshrl.u32 %v109, 7
  %v111 = vsub.s32 0, %v110
  %v112 = vrot.slane %v107, %v111
  %vm114 = vcmask 146432
  %v116 = vsel %vm114, %v102, 0
  %v119 = vsel %vm114, %v103, 0
  %vm121 = vcmask 1041408
  %v123 = vsel %vm121, %v106, 0
  %125 = vmatprep.subr.mxu0 0.0
  %126 = vmatpush1.msra.mxu0 0.0
  %127 = vmatprep.subr.mxu0 0.0
  %128 = vmatpush1.msra.mxu0 0.0
  %129 = vmatprep.subr.mxu0 0.0
  %130 = vmatpush1.msra.mxu0 0.0
  %131 = vmatprep.subr.mxu0 0.0
  %132 = vmatpush1.msra.mxu0 0.0
  %133 = vmatprep.subr.mxu0 0.0
  %134 = vmatpush1.msra.mxu0 0.0
  %135 = vmatprep.subr.mxu0 0.0
  %136 = vmatpush1.msra.mxu0 0.0
  %137 = vmatprep.subr.mxu0 0.0
  %138 = vmatpush1.msra.mxu0 0.0
  %139 = vmatprep.subr.mxu0 0.0
  %140 = vmatpush1.msra.mxu0 0.0
  %141 = vmatprep.subr.mxu0 0.0
  %142 = vmatpush1.msra.mxu0 0.0
  %143 = vmatprep.subr.mxu0 0.0
  %144 = vmatpush1.msra.mxu0 0.0
  %145 = vmatprep.subr.mxu0 0.0
  %146 = vmatpush1.msra.mxu0 0.0
  %147 = vmatprep.subr.mxu0 0.0
  %148 = vmatpush1.msra.mxu0 0.0
  %149 = vmatprep.subr.mxu0 0.0
  %150 = vmatpush1.msra.mxu0 0.0
  %151 = vmatprep.subr.mxu0 0.0
  %152 = vmatpush1.msra.mxu0 %v123
  %153 = vmatprep.subr.mxu0 0.0
  %154 = vmatpush1.msra.mxu0 %v105
  %155 = vmatprep.subr.mxu0 0.0
  %156 = vmatpush1.msra.mxu0 %v104
  %157 = vmatprep.subr.mxu0 0.0
  %158 = vmatpush2.msra.mxu0 0.0
  %159 = vmatprep.subr.mxu0 0.0
  %160 = vmatpush2.msra.mxu0 0.0
  %161 = vmatprep.subr.mxu0 0.0
  %162 = vmatpush2.msra.mxu0 0.0
  %163 = vmatprep.subr.mxu0 0.0
  %164 = vmatpush2.msra.mxu0 0.0
  %165 = vmatprep.subr.mxu0 0.0
  %166 = vmatpush2.msra.mxu0 0.0
  %167 = vmatprep.subr.mxu0 0.0
  %168 = vmatpush2.msra.mxu0 0.0
  %169 = vmatprep.subr.mxu0 0.0
  %170 = vmatpush2.msra.mxu0 0.0
  %171 = vmatprep.subr.mxu0 0.0
  %172 = vmatpush2.msra.mxu0 0.0
  %173 = vmatprep.subr.mxu0 0.0
  %174 = vmatpush2.msra.mxu0 0.0
  %175 = vmatprep.subr.mxu0 0.0
  %176 = vmatpush2.msra.mxu0 0.0
  %177 = vmatprep.subr.mxu0 0.0
  %178 = vmatpush2.msra.mxu0 0.0
  %179 = vmatprep.subr.mxu0 0.0
  %180 = vmatpush2.msra.mxu0 0.0
  %181 = vmatprep.subr.mxu0 0.0
  %182 = vmatpush2.msra.mxu0 0.0
  %183 = vmatprep.subr.mxu0 0.0
  %184 = vmatpush2.msra.mxu0 0.0
  %185 = vmatprep.subr.mxu0 0.0
  %186 = vmatpush2.msra.mxu0 0.0
  %187 = vmatprep.subr.mxu0 0.0
  %188 = vmatpush2.msra.mxu0 0.0
  %189 = vmatprep.mubr.f32.mxu0 0.0
  %190 = vmatmul.mubr.f32.gmra.mxu0 %v116
  %v191 = vpop.f32.mrf.mxu0
  %v192 = vadd.f32 %v112, %v191
  %v193 = vpop.f32.mrf.mxu0
  %194 = vmatprep.mubr.f32.mxu0 0.0
  %195 = vmatmul.mubr.f32.gmra.mxu0 %v119
  %v196 = vpop.f32.mrf.mxu0
  %v197 = vadd.f32 %v112, %v196
  %v198 = vpop.f32.mrf.mxu0
  %199 = vdwg.mxu0
  %v200 = vmax.f32 %v192, 0.0
  %v201 = vmax.f32 %v197, 0.0
  %v202 = vld [vmem:[%s5] sm:$0xff]
  %v203 = vld [vmem:[%s5 + $0x8] sm:$0xff]
  %v204 = vld [vmem:[%s5 + $0x10] sm:$0x3]
  %v205 = vld [vmem:[%s6] sm:$0x1]
  %v207 = vlaneseq
  %v208 = vshrl.u32 %v207, 7
  %v209 = vsub.s32 0, %v208
  %v210 = vrot.slane %v205, %v209
  %v213 = vsel %vm114, %v200, 0
  %v216 = vsel %vm114, %v201, 0
  %v219 = vsel %vm121, %v204, 0
  %221 = vmatprep.subr.mxu0 0.0
  %222 = vmatpush1.msra.mxu0 0.0
  %223 = vmatprep.subr.mxu0 0.0
  %224 = vmatpush1.msra.mxu0 0.0
  %225 = vmatprep.subr.mxu0 0.0
  %226 = vmatpush1.msra.mxu0 0.0
  %227 = vmatprep.subr.mxu0 0.0
  %228 = vmatpush1.msra.mxu0 0.0
  %229 = vmatprep.subr.mxu0 0.0
  %230 = vmatpush1.msra.mxu0 0.0
  %231 = vmatprep.subr.mxu0 0.0
  %232 = vmatpush1.msra.mxu0 0.0
  %233 = vmatprep.subr.mxu0 0.0
  %234 = vmatpush1.msra.mxu0 0.0
  %235 = vmatprep.subr.mxu0 0.0
  %236 = vmatpush1.msra.mxu0 0.0
  %237 = vmatprep.subr.mxu0 0.0
  %238 = vmatpush1.msra.mxu0 0.0
  %239 = vmatprep.subr.mxu0 0.0
  %240 = vmatpush1.msra.mxu0 0.0
  %241 = vmatprep.subr.mxu0 0.0
  %242 = vmatpush1.msra.mxu0 0.0
  %243 = vmatprep.subr.mxu0 0.0
  %244 = vmatpush1.msra.mxu0 0.0
  %245 = vmatprep.subr.mxu0 0.0
  %246 = vmatpush1.msra.mxu0 0.0
  %247 = vmatprep.subr.mxu0 0.0
  %248 = vmatpush1.msra.mxu0 %v219
  %249 = vmatprep.subr.mxu0 0.0
  %250 = vmatpush1.msra.mxu0 %v203
  %251 = vmatprep.subr.mxu0 0.0
  %252 = vmatpush1.msra.mxu0 %v202
  %253 = vmatprep.subr.mxu0 0.0
  %254 = vmatpush2.msra.mxu0 0.0
  %255 = vmatprep.subr.mxu0 0.0
  %256 = vmatpush2.msra.mxu0 0.0
  %257 = vmatprep.subr.mxu0 0.0
  %258 = vmatpush2.msra.mxu0 0.0
  %259 = vmatprep.subr.mxu0 0.0
  %260 = vmatpush2.msra.mxu0 0.0
  %261 = vmatprep.subr.mxu0 0.0
  %262 = vmatpush2.msra.mxu0 0.0
  %263 = vmatprep.subr.mxu0 0.0
  %264 = vmatpush2.msra.mxu0 0.0
  %265 = vmatprep.subr.mxu0 0.0
  %266 = vmatpush2.msra.mxu0 0.0
  %267 = vmatprep.subr.mxu0 0.0
  %268 = vmatpush2.msra.mxu0 0.0
  %269 = vmatprep.subr.mxu0 0.0
  %270 = vmatpush2.msra.mxu0 0.0
  %271 = vmatprep.subr.mxu0 0.0
  %272 = vmatpush2.msra.mxu0 0.0
  %273 = vmatprep.subr.mxu0 0.0
  %274 = vmatpush2.msra.mxu0 0.0
  %275 = vmatprep.subr.mxu0 0.0
  %276 = vmatpush2.msra.mxu0 0.0
  %277 = vmatprep.subr.mxu0 0.0
  %278 = vmatpush2.msra.mxu0 0.0
  %279 = vmatprep.subr.mxu0 0.0
  %280 = vmatpush2.msra.mxu0 0.0
  %281 = vmatprep.subr.mxu0 0.0
  %282 = vmatpush2.msra.mxu0 0.0
  %283 = vmatprep.subr.mxu0 0.0
  %284 = vmatpush2.msra.mxu0 0.0
  %285 = vmatprep.mubr.f32.mxu0 0.0
  %286 = vmatmul.mubr.f32.gmra.mxu0 %v213
  %v287 = vpop.f32.mrf.mxu0
  %v288 = vadd.f32 %v210, %v287
  %v289 = vpop.f32.mrf.mxu0
  %290 = vmatprep.mubr.f32.mxu0 0.0
  %291 = vmatmul.mubr.f32.gmra.mxu0 %v216
  %v292 = vpop.f32.mrf.mxu0
  %v293 = vadd.f32 %v210, %v292
  %v294 = vpop.f32.mrf.mxu0
  %295 = vdwg.mxu0
  %vm296 = vcmask 31744
  %297 = vst.msk [vmem:[%s7] sm:$0xff] %vm296, %v288
  %298 = vst.msk [vmem:[%s7 + $0x8] sm:$0xff] %vm296, %v293
  // Predicated region
  $region30: #{tpu_custom_call.1} parent=0 // pred_check
    _
  $region31: #{tpu_custom_call.1} parent=0 // pred_check_branch
    %300 = sbr.rel (0) target = $region33
  $region32: #{tpu_custom_call.1} parent=0 // pred_region
    _
  $region33: #{tpu_custom_call.1} parent=0 // pred_fallthru
    _
  // Predicated region
  $region34: #{tpu_custom_call.1} parent=0 // pred_check
    _
  $region35: #{tpu_custom_call.1} parent=0 // pred_check_branch
    %302 = sbr.rel (0) target = $region37
  $region36: #{tpu_custom_call.1} parent=0 // pred_region
    _
  $region37: #{tpu_custom_call.1} parent=0 // pred_fallthru
    _

</llo_original>
